<compile_context>
chip_gen: v5e
topology: v5e:2x2
jax: 0.10.0
libtpu: 0.0.40
codegen_flags: <defaults>
</compile_context>

<pallas_src>
import functools

import jax
import jax.numpy as jnp
from jax.experimental import pallas as pl
from jax.experimental.pallas import tpu as pltpu

EPS = 1e-5


def _round_up(x, m):
    return ((x + m - 1) // m) * m


def bert_att_output_kernel(x_ref, res_ref, w_ref, b_ref, g_ref, beta_ref, o_ref):
    # x_ref:   (TM, H)  hidden_states tile        (native dtype)
    # res_ref: (TM, H)  input_tensor (residual)   (native dtype)
    # w_ref:   (H, H)   dense weight, (in, out)   (native dtype)
    # b_ref, g_ref, beta_ref: (1, H) bias / LN gamma / LN beta
    # Dense: feed native-dtype operands straight to the MXU, accumulate in f32.
    h = jnp.dot(x_ref[...], w_ref[...], preferred_element_type=jnp.float32)

    # Dropout: identity in eval mode. Bias + residual on the f32 accumulator.
    y = h + b_ref[...].astype(jnp.float32) + res_ref[...].astype(jnp.float32)

    # LayerNorm over hidden axis: compute centered term once, reuse everywhere.
    mean = jnp.mean(y, axis=-1, keepdims=True)
    d = y - mean
    var = jnp.mean(d * d, axis=-1, keepdims=True)
    norm = d * jax.lax.rsqrt(var + EPS)   # rsqrt -> EUP slot (free vs. VALU)
    o_ref[...] = (
        norm * g_ref[...].astype(jnp.float32) + beta_ref[...].astype(jnp.float32)
    ).astype(o_ref.dtype)


@functools.partial(jax.jit, static_argnames=("tile_m",))
def bert_att_output(hidden_states, input_tensor, w_t, b, gamma, beta, *, tile_m=256):
    # hidden_states, input_tensor: (B, S, H); w_t: (H_in, H_out)
    B, S, H = hidden_states.shape
    M = B * S

    # Largest tile <= tile_m that the token count needs; always a multiple of 8
    # (sublane). Default 256 is a multiple of both 128 (v5e MXU) and 256 (v6e/v7x).
    tm = min(tile_m, _round_up(M, 8))
    Mp = _round_up(M, tm)

    x2d = hidden_states.reshape(M, H)
    r2d = input_tensor.reshape(M, H)
    if Mp != M:
        pad = ((0, Mp - M), (0, 0))
        x2d = jnp.pad(x2d, pad)
        r2d = jnp.pad(r2d, pad)

    b2d = b.reshape(1, H)
    g2d = gamma.reshape(1, H)
    beta2d = beta.reshape(1, H)

    out_dtype = hidden_states.dtype
    # Residual is fully consumed per tile and matches the output buffer -> alias.
    aliases = {1: 0} if r2d.dtype == out_dtype else {}

    # Grid-invariant operands: keep a single VMEM buffer (no double-buffering).
    invariant = dict(pipeline_mode=pl.Buffered(1))

    grid = (Mp // tm,)
    out2d = pl.pallas_call(
        bert_att_output_kernel,
        out_shape=jax.ShapeDtypeStruct((Mp, H), out_dtype),
        grid_spec=pltpu.PrefetchScalarGridSpec(
            num_scalar_prefetch=0,
            grid=grid,
            in_specs=[
                pl.BlockSpec((tm, H), lambda i: (i, 0)),               # hidden_states tile
                pl.BlockSpec((tm, H), lambda i: (i, 0)),               # residual tile
                pl.BlockSpec((H, H), lambda i: (0, 0), **invariant),   # weight (in, out)
                pl.BlockSpec((1, H), lambda i: (0, 0), **invariant),   # bias
                pl.BlockSpec((1, H), lambda i: (0, 0), **invariant),   # LN gamma
                pl.BlockSpec((1, H), lambda i: (0, 0), **invariant),   # LN beta
            ],
            out_specs=pl.BlockSpec((tm, H), lambda i: (i, 0)),
        ),
        compiler_params=pltpu.CompilerParams(
            dimension_semantics=("parallel",),
        ),
        input_output_aliases=aliases,
    )(x2d, r2d, w_t, b2d, g2d, beta2d)

    if Mp != M:
        out2d = out2d[:M]
    return out2d.reshape(B, S, H)


def _reference(hidden_states, input_tensor, w, bias, gamma, beta):
    # Plain-JAX reference matching the PyTorch module (eval mode).
    y = hidden_states @ w.T + bias + input_tensor
    mean = jnp.mean(y, axis=-1, keepdims=True)
    var = jnp.mean((y - mean) ** 2, axis=-1, keepdims=True)
    return (y - mean) / jnp.sqrt(var + EPS) * gamma + beta


if __name__ == "__main__":
    # Small shapes consistent with the module's forward.
    H = 128
    key = jax.random.PRNGKey(0)
    k1, k2, k3, k4 = jax.random.split(key, 4)

    # PyTorch Linear weight is (out, in); the kernel takes its transpose (in, out).
    w = jax.random.normal(k3, (H, H), dtype=jnp.float32) * (1.0 / jnp.sqrt(H))
    w_t = w.T
    bias = jax.random.normal(k4, (H,), dtype=jnp.float32) * 0.01
    gamma = jnp.ones((H,), dtype=jnp.float32)
    beta = jnp.zeros((H,), dtype=jnp.float32)

    # Case 1: token count fits a single tile exactly.
    B, S = 2, 8
    hidden_states = jax.random.normal(k1, (B, S, H), dtype=jnp.float32)
    input_tensor = jax.random.normal(k2, (B, S, H), dtype=jnp.float32)
    out = bert_att_output(hidden_states, input_tensor, w_t, bias, gamma, beta)
    out = jax.block_until_ready(out)
    ref = _reference(hidden_states, input_tensor, w, bias, gamma, beta)
    assert jnp.allclose(out, ref, atol=1e-4, rtol=1e-4), "mismatch vs reference (even M)"

    # Case 2: ragged token count (exercises pad-to-tile + slice path).
    B2, S2 = 2, 7
    hs2 = jax.random.normal(k1, (B2, S2, H), dtype=jnp.float32)
    it2 = jax.random.normal(k2, (B2, S2, H), dtype=jnp.float32)
    out2 = bert_att_output(hs2, it2, w_t, bias, gamma, beta)
    out2 = jax.block_until_ready(out2)
    ref2 = _reference(hs2, it2, w, bias, gamma, beta)
    assert jnp.allclose(out2, ref2, atol=1e-4, rtol=1e-4), "mismatch vs reference (ragged M)"

    print("KERNEL_OK")
</pallas_src>

<mosaic_0001>
module attributes {stable_mosaic.version = 11 : i64} {
  func.func @bert_att_output_kernel(%arg0: i32, %arg1: memref<16x128xf32, #tpu.memory_space<vmem>>, %arg2: memref<16x128xf32, #tpu.memory_space<vmem>>, %arg3: memref<128x128xf32, #tpu.memory_space<vmem>>, %arg4: memref<1x128xf32, #tpu.memory_space<vmem>>, %arg5: memref<1x128xf32, #tpu.memory_space<vmem>>, %arg6: memref<1x128xf32, #tpu.memory_space<vmem>>, %arg7: memref<16x128xf32, #tpu.memory_space<vmem>>) attributes {dimension_semantics = [#tpu.dimension_semantics<parallel>], iteration_bounds = array<i64: 1>, scalar_prefetch = 0 : i64, scratch_operands = 0 : i64, tpu.core_type = #tpu.core_type<tc>, window_params = [{transform_indices = @transform_0, window_bounds = array<i64: 16, 128>}, {transform_indices = @transform_1, window_bounds = array<i64: 16, 128>}, {pipeline_mode = #tpu.pipeline_mode<synchronous>, transform_indices = @transform_2, window_bounds = array<i64: 128, 128>}, {pipeline_mode = #tpu.pipeline_mode<synchronous>, transform_indices = @transform_3, window_bounds = array<i64: 1, 128>}, {pipeline_mode = #tpu.pipeline_mode<synchronous>, transform_indices = @transform_4, window_bounds = array<i64: 1, 128>}, {pipeline_mode = #tpu.pipeline_mode<synchronous>, transform_indices = @transform_5, window_bounds = array<i64: 1, 128>}, {transform_indices = @transform_6, window_bounds = array<i64: 16, 128>}]} {
    %c0 = arith.constant 0 : index
    %c0_0 = arith.constant 0 : index
    %0 = vector.load %arg1[%c0, %c0_0] : memref<16x128xf32, #tpu.memory_space<vmem>>, vector<16x128xf32>
    %c0_1 = arith.constant 0 : index
    %c0_2 = arith.constant 0 : index
    %1 = vector.load %arg3[%c0_1, %c0_2] : memref<128x128xf32, #tpu.memory_space<vmem>>, vector<128x128xf32>
    %cst = arith.constant dense<0.000000e+00> : vector<16x128xf32>
    %2 = tpu.matmul %0, %1, %cst {dimension_numbers = #tpu.dot_dimension_numbers<[1], [0], [0], [1], [0, 0, 1, 1], [], []>} : vector<16x128xf32>, vector<128x128xf32>, vector<16x128xf32> -> vector<16x128xf32>
    %c0_3 = arith.constant 0 : index
    %c0_4 = arith.constant 0 : index
    %3 = vector.load %arg4[%c0_3, %c0_4] : memref<1x128xf32, #tpu.memory_space<vmem>>, vector<1x128xf32>
    %4 = vector.broadcast %3 : vector<1x128xf32> to vector<16x128xf32>
    %5 = arith.addf %2, %4 : vector<16x128xf32>
    %c0_5 = arith.constant 0 : index
    %c0_6 = arith.constant 0 : index
    %6 = vector.load %arg2[%c0_5, %c0_6] : memref<16x128xf32, #tpu.memory_space<vmem>>, vector<16x128xf32>
    %7 = arith.addf %5, %6 : vector<16x128xf32>
    %cst_7 = arith.constant dense<0.000000e+00> : vector<16xf32>
    %8 = vector.multi_reduction <add>, %7, %cst_7 [1] : vector<16x128xf32> to vector<16xf32>
    %9 = vector.shape_cast %8 : vector<16xf32> to vector<16x1xf32>
    %cst_8 = arith.constant 1.280000e+02 : f32
    %10 = vector.broadcast %cst_8 : f32 to vector<16x1xf32>
    %11 = arith.divf %9, %10 : vector<16x1xf32>
    %12 = vector.broadcast %11 : vector<16x1xf32> to vector<16x128xf32>
    %13 = arith.subf %7, %12 : vector<16x128xf32>
    %14 = arith.mulf %13, %13 : vector<16x128xf32>
    %cst_9 = arith.constant dense<0.000000e+00> : vector<16xf32>
    %15 = vector.multi_reduction <add>, %14, %cst_9 [1] : vector<16x128xf32> to vector<16xf32>
    %16 = vector.shape_cast %15 : vector<16xf32> to vector<16x1xf32>
    %cst_10 = arith.constant 1.280000e+02 : f32
    %17 = vector.broadcast %cst_10 : f32 to vector<16x1xf32>
    %18 = arith.divf %16, %17 : vector<16x1xf32>
    %cst_11 = arith.constant 9.99999974E-6 : f32
    %19 = vector.broadcast %cst_11 : f32 to vector<16x1xf32>
    %20 = arith.addf %18, %19 : vector<16x1xf32>
    %21 = math.rsqrt %20 : vector<16x1xf32>
    %22 = vector.broadcast %21 : vector<16x1xf32> to vector<16x128xf32>
    %23 = arith.mulf %13, %22 : vector<16x128xf32>
    %c0_12 = arith.constant 0 : index
    %c0_13 = arith.constant 0 : index
    %24 = vector.load %arg5[%c0_12, %c0_13] : memref<1x128xf32, #tpu.memory_space<vmem>>, vector<1x128xf32>
    %25 = vector.broadcast %24 : vector<1x128xf32> to vector<16x128xf32>
    %26 = arith.mulf %23, %25 : vector<16x128xf32>
    %c0_14 = arith.constant 0 : index
    %c0_15 = arith.constant 0 : index
    %27 = vector.load %arg6[%c0_14, %c0_15] : memref<1x128xf32, #tpu.memory_space<vmem>>, vector<1x128xf32>
    %28 = vector.broadcast %27 : vector<1x128xf32> to vector<16x128xf32>
    %29 = arith.addf %26, %28 : vector<16x128xf32>
    %c0_16 = arith.constant 0 : index
    %c0_17 = arith.constant 0 : index
    %30 = vector.load %arg7[%c0_16, %c0_17] : memref<16x128xf32, #tpu.memory_space<vmem>>, vector<16x128xf32>
    tpu.vector_store %arg7[%c0_16, %c0_17], %29 {strides = array<i32>} : memref<16x128xf32, #tpu.memory_space<vmem>>, vector<16x128xf32>,
    return
  }
  func.func @transform_0(%arg0: i32) -> (i32, i32) {
    %c0_i32 = arith.constant 0 : i32
    %c0_i32_0 = arith.constant 0 : i32
    return %arg0, %c0_i32 : i32, i32
  }
  func.func @transform_1(%arg0: i32) -> (i32, i32) {
    %c0_i32 = arith.constant 0 : i32
    %c0_i32_0 = arith.constant 0 : i32
    return %arg0, %c0_i32 : i32, i32
  }
  func.func @transform_2(%arg0: i32) -> (i32, i32) {
    %c0_i32 = arith.constant 0 : i32
    %c0_i32_0 = arith.constant 0 : i32
    %c0_i32_1 = arith.constant 0 : i32
    return %c0_i32, %c0_i32_0 : i32, i32
  }
  func.func @transform_3(%arg0: i32) -> (i32, i32) {
    %c0_i32 = arith.constant 0 : i32
    %c0_i32_0 = arith.constant 0 : i32
    %c0_i32_1 = arith.constant 0 : i32
    return %c0_i32, %c0_i32_0 : i32, i32
  }
  func.func @transform_4(%arg0: i32) -> (i32, i32) {
    %c0_i32 = arith.constant 0 : i32
    %c0_i32_0 = arith.constant 0 : i32
    %c0_i32_1 = arith.constant 0 : i32
    return %c0_i32, %c0_i32_0 : i32, i32
  }
  func.func @transform_5(%arg0: i32) -> (i32, i32) {
    %c0_i32 = arith.constant 0 : i32
    %c0_i32_0 = arith.constant 0 : i32
    %c0_i32_1 = arith.constant 0 : i32
    return %c0_i32, %c0_i32_0 : i32, i32
  }
  func.func @transform_6(%arg0: i32) -> (i32, i32) {
    %c0_i32 = arith.constant 0 : i32
    %c0_i32_0 = arith.constant 0 : i32
    return %arg0, %c0_i32 : i32, i32
  }
}

</mosaic_0001>

<llo_original>
// kernel: bert_att_output.1
$region0: #{bert_att_output.1}
  #allocation0 [shape = 'u32[]', space=smem, size = 0x4, offset = 0x4, fixed_abs, tag = 'smem constant byte address 0x4 - core index']
  #allocation1 [shape = 'u32[72,128]{1,0:T(1,128)}', space=vmem, size = 0x9000, scoped, tag = 'internal scratch']
  %s0 = inlined_call_operand.vmem [shape: f32[16,128], index: 0, kind: input, shape index: {}]
  %s1 = inlined_call_operand.vmem [shape: f32[16,128], index: 1, kind: input, shape index: {}, may-alias: {1,6}]
  %s2 = inlined_call_operand.hbm [shape: f32[128,128], index: 2, kind: input, shape index: {}]
  %s3 = inlined_call_operand.vmem [shape: f32[1,128], index: 3, kind: input, shape index: {}]
  %s4 = inlined_call_operand.vmem [shape: f32[1,128], index: 4, kind: input, shape index: {}]
  %s5 = inlined_call_operand.vmem [shape: f32[1,128], index: 5, kind: input, shape index: {}]
  %s6 = inlined_call_operand.vmem [shape: f32[16,128], index: 6, kind: output, shape index: {}, may-alias: {1,6}]
  %s7 = sld [smem:[#allocation0]]
  $region38: #{bert_att_output.1} parent=0
    _
  %s9 = ssub.s32 1, %s7
  %s10 = scalar_select 0, %s9, %s7
  $region1: #{bert_att_output.1} parent=0
    #allocation2 [shape = 'u8[65536]{0}', space=vmem, size = 0x10000, scoped, tag = 'input window, operand 2, single buffered']
    #allocation3 [shape = 's32[1]{0}', space=sflag, size = 0x4, scoped, tag = 'scoped memory for bert_att_output.1']
    %11 = vsyncpa [#allocation3], 0
    // Predicated region
    $region2: #{bert_att_output.1} parent=1 // pred_check
      _
    $region3: #{bert_att_output.1} parent=1 // pred_check_branch
      %13 = sbr.rel (0) target = $region5
    $region4: #{bert_att_output.1} parent=1 // pred_region
      _
    $region5: #{bert_att_output.1} parent=1 // pred_fallthru
      _
    // Predicated region
    $region6: #{bert_att_output.1} parent=1 // pred_check
      _
    $region7: #{bert_att_output.1} parent=1 // pred_check_branch
      %15 = sbr.rel (0) target = $region9
    $region8: #{bert_att_output.1} parent=1 // pred_region
      _
    $region9: #{bert_att_output.1} parent=1 // pred_fallthru
      _
    // Predicated region
    $region10: #{bert_att_output.1} parent=1 // pred_check
      _
    $region11: #{bert_att_output.1} parent=1 // pred_check_branch
      %17 = sbr.rel (0) target = $region13
    $region12: #{bert_att_output.1} parent=1 // pred_region
      %19 = vsyncadd [#allocation3], 0
      %s20 = sshll.u32 %s2, 4
      %s21 = int_to_ptr.hbm [resolvable:$true] %s20
      %s22 = sshll.u32 [#allocation2], 4
      %s23 = int_to_ptr.vmem [resolvable:$true] %s22
      %28 = dma.hbm_to_vmem [thread:$0]  %s21, 2048, %s23, [#allocation3], 128, 128, 8
    $region13: #{bert_att_output.1} parent=1 // pred_fallthru
      _
    // Predicated region
    $region14: #{bert_att_output.1} parent=1 // pred_check
      _
    $region15: #{bert_att_output.1} parent=1 // pred_check_branch
      %30 = sbr.rel (0) target = $region17
    $region16: #{bert_att_output.1} parent=1 // pred_region
      _
    $region17: #{bert_att_output.1} parent=1 // pred_fallthru
      _
    // Predicated region
    $region18: #{bert_att_output.1} parent=1 // pred_check
      _
    $region19: #{bert_att_output.1} parent=1 // pred_check_branch
      %32 = sbr.rel (0) target = $region21
    $region20: #{bert_att_output.1} parent=1 // pred_region
      _
    $region21: #{bert_att_output.1} parent=1 // pred_fallthru
      _
    // Predicated region
    $region22: #{bert_att_output.1} parent=1 // pred_check
      _
    $region23: #{bert_att_output.1} parent=1 // pred_check_branch
      %34 = sbr.rel (0) target = $region25
    $region24: #{bert_att_output.1} parent=1 // pred_region
      _
    $region25: #{bert_att_output.1} parent=1 // pred_fallthru
      _
    // Predicated region
    $region26: #{bert_att_output.1} parent=1 // pred_check
      _
    $region27: #{bert_att_output.1} parent=1 // pred_check_branch
      %36 = sbr.rel (0) target = $region29
    $region28: #{bert_att_output.1} parent=1 // pred_region
      %38 = dma.done [#allocation3], 2048
    $region29: #{bert_att_output.1} parent=1 // pred_fallthru
      _
    %v39 = vld [vmem:[%s0] sm:$0xff]
    %v40 = vld [vmem:[%s0 + $0x8] sm:$0xff]
    %v41 = vld [vmem:[#allocation2] sm:$0xff]
    %v42 = vld [vmem:[#allocation2 + $0x8] sm:$0xff]
    %v43 = vld [vmem:[#allocation2 + $0x10] sm:$0xff]
    %v44 = vld [vmem:[#allocation2 + $0x18] sm:$0xff]
    %v45 = vld [vmem:[#allocation2 + $0x20] sm:$0xff]
    %v46 = vld [vmem:[#allocation2 + $0x28] sm:$0xff]
    %v47 = vld [vmem:[#allocation2 + $0x30] sm:$0xff]
    %v48 = vld [vmem:[#allocation2 + $0x38] sm:$0xff]
    %v49 = vld [vmem:[#allocation2 + $0x40] sm:$0xff]
    %v50 = vld [vmem:[#allocation2 + $0x48] sm:$0xff]
    %v51 = vld [vmem:[#allocation2 + $0x50] sm:$0xff]
    %v52 = vld [vmem:[#allocation2 + $0x58] sm:$0xff]
    %v53 = vld [vmem:[#allocation2 + $0x60] sm:$0xff]
    %v54 = vld [vmem:[#allocation2 + $0x68] sm:$0xff]
    %v55 = vld [vmem:[#allocation2 + $0x70] sm:$0xff]
    %v56 = vld [vmem:[#allocation2 + $0x78] sm:$0xff]
    %v57 = vld [vmem:[%s3] sm:$0x1]
    %v59 = vperm.slane %v57, 0
    %61 = vmatpush.msra.mxu0 %v56
    %62 = vmatpush.msra.mxu0 %v55
    %63 = vmatpush.msra.mxu0 %v54
    %64 = vmatpush.msra.mxu0 %v53
    %65 = vmatpush.msra.mxu0 %v52
    %66 = vmatpush.msra.mxu0 %v51
    %67 = vmatpush.msra.mxu0 %v50
    %68 = vmatpush.msra.mxu0 %v49
    %69 = vmatpush.msra.mxu0 %v48
    %70 = vmatpush.msra.mxu0 %v47
    %71 = vmatpush.msra.mxu0 %v46
    %72 = vmatpush.msra.mxu0 %v45
    %73 = vmatpush.msra.mxu0 %v44
    %74 = vmatpush.msra.mxu0 %v43
    %75 = vmatpush.msra.mxu0 %v42
    %76 = vmatpush.msra.mxu0 %v41
    %77 = vmatmul.f32.gmra.mxu0 %v39
    %v78 = vpop.f32.mrf.mxu0
    %v79 = vadd.f32 %v59, %v78
    %80 = vmatmul.f32.gmra.mxu0 %v40
    %v81 = vpop.f32.mrf.mxu0
    %v82 = vadd.f32 %v59, %v81
    %83 = vdwg.mxu0
    %v84 = vld [vmem:[%s1] sm:$0xff]
    %v85 = vld [vmem:[%s1 + $0x8] sm:$0xff]
    %v86 = vadd.f32 %v79, %v84
    %v87 = vadd.f32 %v82, %v85
    %88 = vadd.xlane.f32.xlu0 %v86
    %v89 = vpop.xlane.xlu0 %88
    %90 = vadd.xlane.f32.xlu0 %v87
    %v91 = vpop.xlane.xlu0 %90
    %v92 = vrcp.pop 128.0
    %v93 = vmul.f32 128.0, %v92
    %v94 = vsub.f32 1.0, %v93
    %v95 = vmul.f32 %v92, %v94
    %v96 = vadd.f32 %v92, %v95
    %vm97 = vweird.f32 %v92
    %v98 = vsel %vm97, %v92, %v96
    %v99 = vmul.f32 %v89, %v98
    %v100 = vmul.f32 %v91, %v98
    %v101 = vsub.f32 %v86, %v99
    %v102 = vsub.f32 %v87, %v100
    %v103 = vmul.f32 %v101, %v101
    %v104 = vmul.f32 %v102, %v102
    %105 = vadd.xlane.f32.xlu0 %v103
    %v106 = vpop.xlane.xlu0 %105
    %107 = vadd.xlane.f32.xlu0 %v104
    %v108 = vpop.xlane.xlu0 %107
    %v109 = vmul.f32 %v106, %v98
    %v110 = vmul.f32 %v108, %v98
    %v111 = vadd.f32 %v109, 1e-05
    %v112 = vadd.f32 %v110, 1e-05
    %v113 = vrsqrt.pop %v111
    %v114 = vmul.f32 %v113, %v111
    %v115 = vmul.f32 %v114, %v113
    %v116 = vmul.f32 0.5, %v115
    %v117 = vsub.f32 1.5, %v116
    %v118 = vmul.f32 %v113, %v117
    %vm119 = vweird.f32 %v111
    %vm120 = vweird.f32 %v113
    %vm121 = vmor %vm119, %vm120
    %v122 = vsel %vm121, %v113, %v118
    %v123 = vrsqrt.pop %v112
    %v124 = vmul.f32 %v123, %v112
    %v125 = vmul.f32 %v124, %v123
    %v126 = vmul.f32 0.5, %v125
    %v127 = vsub.f32 1.5, %v126
    %v128 = vmul.f32 %v123, %v127
    %vm129 = vweird.f32 %v112
    %vm130 = vweird.f32 %v123
    %vm131 = vmor %vm129, %vm130
    %v132 = vsel %vm131, %v123, %v128
    %v133 = vmul.f32 %v101, %v122
    %v134 = vmul.f32 %v102, %v132
    %v135 = vld [vmem:[%s4] sm:$0x1]
    %v137 = vperm.slane %v135, 0
    %v139 = vmul.f32 %v133, %v137
    %v140 = vmul.f32 %v134, %v137
    %v141 = vld [vmem:[%s5] sm:$0x1]
    %v143 = vperm.slane %v141, 0
    %v145 = vadd.f32 %v139, %v143
    %v146 = vadd.f32 %v140, %v143
    %147 = vst [vmem:[%s6] sm:$0xff] %v145
    %148 = vst [vmem:[%s6 + $0x8] sm:$0xff] %v146
    // Predicated region
    $region30: #{bert_att_output.1} parent=1 // pred_check
      _
    $region31: #{bert_att_output.1} parent=1 // pred_check_branch
      %150 = sbr.rel (0) target = $region33
    $region32: #{bert_att_output.1} parent=1 // pred_region
      _
    $region33: #{bert_att_output.1} parent=1 // pred_fallthru
      _
    // Predicated region
    $region34: #{bert_att_output.1} parent=1 // pred_check
      _
    $region35: #{bert_att_output.1} parent=1 // pred_check_branch
      %152 = sbr.rel (0) target = $region37
    $region36: #{bert_att_output.1} parent=1 // pred_region
      _
    $region37: #{bert_att_output.1} parent=1 // pred_fallthru
      _
    %153 = vsyncpa [#allocation3], 1

</llo_original>
